<compile_context>
chip_gen: v5e
topology: v5e:2x2
jax: 0.10.0
libtpu: 0.0.40
codegen_flags: <defaults>
</compile_context>

<pallas_src>
import jax
import jax.numpy as jnp
from jax import lax
from jax.experimental import pallas as pl
from jax.experimental.pallas import tpu as pltpu

PAD = 128          # lane padding for the HIDDEN-dim hidden activation
HIDDEN = 32        # augment MLP hidden width
MU = 1.0           # Van der Pol damping coefficient (the "FMU" physics)
MAX_CHUNK = 1024   # Euler steps per pallas_call (bounds the SMEM output)


def hybrid_euler_kernel(dts_ref, zin_ref, b2_ref, params_ref, out_ref):
    """Euler integration of dz/dt = f_vdp(z) + MLP(z) for one chunk.

    dts_ref   : SMEM (n,)   f32   per-step dt for this chunk
    zin_ref   : SMEM (2,)   f32   state entering the chunk (z1, z2)
    b2_ref    : SMEM (2,)   f32   second-layer bias
    params_ref: VMEM (8, PAD) f32 packed MLP parameters (zero-padded lanes):
                  rows 0:2 : W1[0, :HIDDEN]  (duplicated on both sublanes)
                  rows 2:4 : W1[1, :HIDDEN]  (duplicated)
                  rows 4:6 : b1[:HIDDEN]     (duplicated)
                  row  6   : W2[:HIDDEN, 0]
                  row  7   : W2[:HIDDEN, 1]
                Padding invariant: lanes >= HIDDEN are zero in EVERY row.
                (tanh(0)=0 there and W2^T lanes are 0, so the fused reduction
                 needs no mask — keep this invariant!)
    out_ref   : SMEM (2, n) f32   lane-dense trajectory of NEW states:
                  out[:, i] = z_{i+1}   (row 0 = z1, row 1 = z2)
    """
    # ---- hoisted parameter loads: direct 2-sublane VMEM row loads, once ----
    w1a = params_ref[0:2, :]                  # (2, PAD)  z1 coefficient rows
    w1b = params_ref[2:4, :]                  # (2, PAD)  z2 coefficient rows
    b1v = params_ref[4:6, :]                  # (2, PAD)  layer-1 bias rows
    w2t = params_ref[6:8, :]                  # (2, PAD)  W2^T (out0 / out1 rows)
    b2_0 = b2_ref[0]
    b2_1 = b2_ref[1]

    # ---- state enters as scalars in the loop carry (no VMEM scratch) -------
    z1_0 = zin_ref[0]
    z2_0 = zin_ref[1]

    n_steps = dts_ref.shape[0]                # static trip count

    def step(i, carry):
        z1, z2 = carry
        dt = dts_ref[i]

        # --- augment_model layer 1: (2, PAD) VPU slab + EUP tanh ------------
        # Both sublanes hold the identical hidden vector (duplicated params);
        # lanes >= HIDDEN stay exactly 0 by the zero-padding invariant.
        h = jnp.tanh(z1 * w1a + z2 * w1b + b1v)              # (2, PAD)

        # --- augment_model layer 2: ONE fused XLU lane reduction ------------
        aug = jnp.sum(h * w2t, axis=-1, keepdims=True)       # (2, 1)
        aug1 = aug[0, 0] + b2_0
        aug2 = aug[1, 0] + b2_1

        # --- FMU surrogate: Van der Pol right-hand side (scalar path) -------
        # TODO(synk): the real module calls fmu.setTime / evaluate_fmu through
        # C pointers; replaced here by the known VdP right-hand side.
        dz1 = z2
        dz2 = MU * (1.0 - z1 * z1) * z2 - z1

        # --- explicit Euler update ------------------------------------------
        z1n = z1 + dt * (dz1 + aug1)
        z2n = z2 + dt * (dz2 + aug2)

        # lane-dense trajectory write: two scalar SMEM stores per step
        # (off the next step's dependency chain).
        out_ref[0, i] = z1n
        out_ref[1, i] = z2n
        return (z1n, z2n)

    unroll = True if n_steps <= 64 else 16
    lax.fori_loop(0, n_steps, step, (z1_0, z2_0), unroll=unroll)
    # TODO(synk): `terminateSimulation` early-break from the FMU has no
    # in-kernel equivalent (fixed trip count is used instead).


def _run_chunk(dts_chunk, z_init, b2, params):
    n = dts_chunk.shape[0]
    return pl.pallas_call(
        hybrid_euler_kernel,
        out_shape=jax.ShapeDtypeStruct((2, n), jnp.float32),
        in_specs=[
            pl.BlockSpec(memory_space=pltpu.MemorySpace.SMEM),   # dts
            pl.BlockSpec(memory_space=pltpu.MemorySpace.SMEM),   # z_init
            pl.BlockSpec(memory_space=pltpu.MemorySpace.SMEM),   # b2
            pl.BlockSpec(memory_space=pltpu.MemorySpace.VMEM),   # packed params
        ],
        out_specs=pl.BlockSpec(memory_space=pltpu.MemorySpace.SMEM),
    )(dts_chunk, z_init, b2, params)


def hybrid_forward(z0, t, w1, b1, w2, b2):
    """Pure-JAX wrapper: packs parameters, launches chunked kernel, returns (T, 2)."""
    T = t.shape[0]
    z0 = jnp.asarray(z0, jnp.float32)
    if T <= 1:                                 # degenerate trajectory guard
        return z0[None, :]

    t = jnp.asarray(t, jnp.float32)
    dts = t[1:] - t[:-1]                       # (T-1,)

    # Pack the tiny MLP into one (8, PAD) VMEM tile with the fused/duplicated
    # layout.  Zero-padding invariant: lanes >= HIDDEN are zero in every row —
    # required for the mask-free fused reduction inside the kernel.
    assert HIDDEN <= PAD
    w1_0 = w1[0].astype(jnp.float32)
    w1_1 = w1[1].astype(jnp.float32)
    b1f = b1.astype(jnp.float32)
    params = jnp.zeros((8, PAD), jnp.float32)
    params = params.at[0, :HIDDEN].set(w1_0)
    params = params.at[1, :HIDDEN].set(w1_0)
    params = params.at[2, :HIDDEN].set(w1_1)
    params = params.at[3, :HIDDEN].set(w1_1)
    params = params.at[4, :HIDDEN].set(b1f)
    params = params.at[5, :HIDDEN].set(b1f)
    params = params.at[6, :HIDDEN].set(w2[:, 0].astype(jnp.float32))
    params = params.at[7, :HIDDEN].set(w2[:, 1].astype(jnp.float32))
    b2f = jnp.asarray(b2, jnp.float32)

    # ---- chunking over the time axis (bounds SMEM output per call) ---------
    n_total = T - 1
    chunk = min(n_total, MAX_CHUNK)
    nchunks = -(-n_total // chunk)
    pad = nchunks * chunk - n_total
    if pad:
        # zero-dt padding steps leave the state unchanged; sliced off below.
        dts = jnp.concatenate([dts, jnp.zeros((pad,), jnp.float32)])

    z = z0
    pieces = [z0[:, None]]
    for c in range(nchunks):
        traj_c = _run_chunk(dts[c * chunk:(c + 1) * chunk], z, b2f, params)
        pieces.append(traj_c)
        z = traj_c[:, -1]

    out = jnp.concatenate(pieces, axis=1)[:, :T]   # (2, T) lane-dense
    return out.T                                   # (T, 2), matching the module


def reference_forward(z0, t, w1, b1, w2, b2):
    """Pure-JAX reference of the same Euler loop (for sanity checking)."""
    T = t.shape[0]
    z = jnp.zeros((T, 2), jnp.float32).at[0].set(z0)

    def body(i, zarr):
        zi = zarr[i]
        dt = t[i + 1] - t[i]
        phys = jnp.array([zi[1],
                          MU * (1.0 - zi[0] * zi[0]) * zi[1] - zi[0]],
                         jnp.float32)
        aug = jnp.tanh(zi @ w1 + b1) @ w2 + b2
        return zarr.at[i + 1].set(zi + dt * (phys + aug))

    return lax.fori_loop(0, T - 1, body, z)


if __name__ == "__main__":
    key = jax.random.PRNGKey(0)
    k1, k2, k3, k4 = jax.random.split(key, 4)

    # Small deterministic setup: T=8 time points, state dim 2, hidden 32.
    T = 8
    t = jnp.linspace(0.0, 0.7, T).astype(jnp.float32)      # (8,)
    z0 = jnp.array([2.0, 0.0], jnp.float32)                # (2,)

    w1 = (0.1 * jax.random.normal(k1, (2, HIDDEN))).astype(jnp.float32)
    b1 = (0.1 * jax.random.normal(k2, (HIDDEN,))).astype(jnp.float32)
    w2 = (0.1 * jax.random.normal(k3, (HIDDEN, 2))).astype(jnp.float32)
    b2 = (0.1 * jax.random.normal(k4, (2,))).astype(jnp.float32)

    z_traj = jax.block_until_ready(hybrid_forward(z0, t, w1, b1, w2, b2))
    z_ref = jax.block_until_ready(reference_forward(z0, t, w1, b1, w2, b2))

    assert z_traj.shape == (T, 2)
    assert bool(jnp.all(jnp.isfinite(z_traj)))
    assert bool(jnp.allclose(z_traj, z_ref, atol=1e-4, rtol=1e-4))

    print("KERNEL_OK")
</pallas_src>

<mosaic_0001>
module attributes {stable_mosaic.version = 11 : i64} {
  func.func @hybrid_euler_kernel(%arg0: memref<7xf32, #tpu.memory_space<smem>>, %arg1: memref<2xf32, #tpu.memory_space<smem>>, %arg2: memref<2xf32, #tpu.memory_space<smem>>, %arg3: memref<8x128xf32, #tpu.memory_space<vmem>>, %arg4: memref<2x7xf32, #tpu.memory_space<smem>>) attributes {dimension_semantics = [], scalar_prefetch = 0 : i64, scratch_operands = 0 : i64, tpu.core_type = #tpu.core_type<tc>} {
    %c0 = arith.constant 0 : index
    %c0_0 = arith.constant 0 : index
    %0 = vector.load %arg3[%c0, %c0_0] : memref<8x128xf32, #tpu.memory_space<vmem>>, vector<2x128xf32>
    %c2 = arith.constant 2 : index
    %c0_1 = arith.constant 0 : index
    %1 = vector.load %arg3[%c2, %c0_1] : memref<8x128xf32, #tpu.memory_space<vmem>>, vector<2x128xf32>
    %c4 = arith.constant 4 : index
    %c0_2 = arith.constant 0 : index
    %2 = vector.load %arg3[%c4, %c0_2] : memref<8x128xf32, #tpu.memory_space<vmem>>, vector<2x128xf32>
    %c6 = arith.constant 6 : index
    %c0_3 = arith.constant 0 : index
    %3 = vector.load %arg3[%c6, %c0_3] : memref<8x128xf32, #tpu.memory_space<vmem>>, vector<2x128xf32>
    %c0_4 = arith.constant 0 : index
    %4 = memref.load %arg2[%c0_4] : memref<2xf32, #tpu.memory_space<smem>>
    %c1 = arith.constant 1 : index
    %5 = memref.load %arg2[%c1] : memref<2xf32, #tpu.memory_space<smem>>
    %c0_5 = arith.constant 0 : index
    %6 = memref.load %arg1[%c0_5] : memref<2xf32, #tpu.memory_space<smem>>
    %c1_6 = arith.constant 1 : index
    %7 = memref.load %arg1[%c1_6] : memref<2xf32, #tpu.memory_space<smem>>
    %c0_i32 = arith.constant 0 : i32
    %8 = arith.index_cast %c0_i32 : i32 to index
    %9 = memref.load %arg0[%8] : memref<7xf32, #tpu.memory_space<smem>>
    %10 = vector.broadcast %6 : f32 to vector<2x128xf32>
    %11 = arith.mulf %10, %0 : vector<2x128xf32>
    %12 = vector.broadcast %7 : f32 to vector<2x128xf32>
    %13 = arith.mulf %12, %1 : vector<2x128xf32>
    %14 = arith.addf %11, %13 : vector<2x128xf32>
    %15 = arith.addf %14, %2 : vector<2x128xf32>
    %16 = math.tanh %15 : vector<2x128xf32>
    %17 = arith.mulf %16, %3 : vector<2x128xf32>
    %cst = arith.constant dense<0.000000e+00> : vector<2xf32>
    %18 = vector.multi_reduction <add>, %17, %cst [1] : vector<2x128xf32> to vector<2xf32>
    %19 = vector.shape_cast %18 : vector<2xf32> to vector<2x1xf32>
    %20 = vector.extract_strided_slice %19 {offsets = [0, 0], sizes = [1, 1], strides = [1, 1]} : vector<2x1xf32> to vector<1x1xf32>
    %21 = vector.extract %20[0, 0] : f32 from vector<1x1xf32>
    %22 = arith.addf %21, %4 : f32
    %23 = vector.extract_strided_slice %19 {offsets = [1, 0], sizes = [1, 1], strides = [1, 1]} : vector<2x1xf32> to vector<1x1xf32>
    %24 = vector.extract %23[0, 0] : f32 from vector<1x1xf32>
    %25 = arith.addf %24, %5 : f32
    %26 = arith.mulf %6, %6 : f32
    %cst_7 = arith.constant 1.000000e+00 : f32
    %27 = arith.subf %cst_7, %26 : f32
    %cst_8 = arith.constant 1.000000e+00 : f32
    %28 = arith.mulf %cst_8, %27 : f32
    %29 = arith.mulf %28, %7 : f32
    %30 = arith.subf %29, %6 : f32
    %31 = arith.addf %7, %22 : f32
    %32 = arith.mulf %9, %31 : f32
    %33 = arith.addf %6, %32 : f32
    %34 = arith.addf %30, %25 : f32
    %35 = arith.mulf %9, %34 : f32
    %36 = arith.addf %7, %35 : f32
    %c0_9 = arith.constant 0 : index
    %37 = arith.index_cast %c0_i32 : i32 to index
    %38 = memref.load %arg4[%c0_9, %37] : memref<2x7xf32, #tpu.memory_space<smem>>
    memref.store %33, %arg4[%c0_9, %37] : memref<2x7xf32, #tpu.memory_space<smem>>
    %c1_10 = arith.constant 1 : index
    %39 = arith.index_cast %c0_i32 : i32 to index
    %40 = memref.load %arg4[%c1_10, %39] : memref<2x7xf32, #tpu.memory_space<smem>>
    memref.store %36, %arg4[%c1_10, %39] : memref<2x7xf32, #tpu.memory_space<smem>>
    %c1_i32 = arith.constant 1 : i32
    %41 = arith.index_cast %c1_i32 : i32 to index
    %42 = memref.load %arg0[%41] : memref<7xf32, #tpu.memory_space<smem>>
    %43 = vector.broadcast %33 : f32 to vector<2x128xf32>
    %44 = arith.mulf %43, %0 : vector<2x128xf32>
    %45 = vector.broadcast %36 : f32 to vector<2x128xf32>
    %46 = arith.mulf %45, %1 : vector<2x128xf32>
    %47 = arith.addf %44, %46 : vector<2x128xf32>
    %48 = arith.addf %47, %2 : vector<2x128xf32>
    %49 = math.tanh %48 : vector<2x128xf32>
    %50 = arith.mulf %49, %3 : vector<2x128xf32>
    %cst_11 = arith.constant dense<0.000000e+00> : vector<2xf32>
    %51 = vector.multi_reduction <add>, %50, %cst_11 [1] : vector<2x128xf32> to vector<2xf32>
    %52 = vector.shape_cast %51 : vector<2xf32> to vector<2x1xf32>
    %53 = vector.extract_strided_slice %52 {offsets = [0, 0], sizes = [1, 1], strides = [1, 1]} : vector<2x1xf32> to vector<1x1xf32>
    %54 = vector.extract %53[0, 0] : f32 from vector<1x1xf32>
    %55 = arith.addf %54, %4 : f32
    %56 = vector.extract_strided_slice %52 {offsets = [1, 0], sizes = [1, 1], strides = [1, 1]} : vector<2x1xf32> to vector<1x1xf32>
    %57 = vector.extract %56[0, 0] : f32 from vector<1x1xf32>
    %58 = arith.addf %57, %5 : f32
    %59 = arith.mulf %33, %33 : f32
    %cst_12 = arith.constant 1.000000e+00 : f32
    %60 = arith.subf %cst_12, %59 : f32
    %cst_13 = arith.constant 1.000000e+00 : f32
    %61 = arith.mulf %cst_13, %60 : f32
    %62 = arith.mulf %61, %36 : f32
    %63 = arith.subf %62, %33 : f32
    %64 = arith.addf %36, %55 : f32
    %65 = arith.mulf %42, %64 : f32
    %66 = arith.addf %33, %65 : f32
    %67 = arith.addf %63, %58 : f32
    %68 = arith.mulf %42, %67 : f32
    %69 = arith.addf %36, %68 : f32
    %c0_14 = arith.constant 0 : index
    %70 = arith.index_cast %c1_i32 : i32 to index
    %71 = memref.load %arg4[%c0_14, %70] : memref<2x7xf32, #tpu.memory_space<smem>>
    memref.store %66, %arg4[%c0_14, %70] : memref<2x7xf32, #tpu.memory_space<smem>>
    %c1_15 = arith.constant 1 : index
    %72 = arith.index_cast %c1_i32 : i32 to index
    %73 = memref.load %arg4[%c1_15, %72] : memref<2x7xf32, #tpu.memory_space<smem>>
    memref.store %69, %arg4[%c1_15, %72] : memref<2x7xf32, #tpu.memory_space<smem>>
    %c2_i32 = arith.constant 2 : i32
    %74 = arith.index_cast %c2_i32 : i32 to index
    %75 = memref.load %arg0[%74] : memref<7xf32, #tpu.memory_space<smem>>
    %76 = vector.broadcast %66 : f32 to vector<2x128xf32>
    %77 = arith.mulf %76, %0 : vector<2x128xf32>
    %78 = vector.broadcast %69 : f32 to vector<2x128xf32>
    %79 = arith.mulf %78, %1 : vector<2x128xf32>
    %80 = arith.addf %77, %79 : vector<2x128xf32>
    %81 = arith.addf %80, %2 : vector<2x128xf32>
    %82 = math.tanh %81 : vector<2x128xf32>
    %83 = arith.mulf %82, %3 : vector<2x128xf32>
    %cst_16 = arith.constant dense<0.000000e+00> : vector<2xf32>
    %84 = vector.multi_reduction <add>, %83, %cst_16 [1] : vector<2x128xf32> to vector<2xf32>
    %85 = vector.shape_cast %84 : vector<2xf32> to vector<2x1xf32>
    %86 = vector.extract_strided_slice %85 {offsets = [0, 0], sizes = [1, 1], strides = [1, 1]} : vector<2x1xf32> to vector<1x1xf32>
    %87 = vector.extract %86[0, 0] : f32 from vector<1x1xf32>
    %88 = arith.addf %87, %4 : f32
    %89 = vector.extract_strided_slice %85 {offsets = [1, 0], sizes = [1, 1], strides = [1, 1]} : vector<2x1xf32> to vector<1x1xf32>
    %90 = vector.extract %89[0, 0] : f32 from vector<1x1xf32>
    %91 = arith.addf %90, %5 : f32
    %92 = arith.mulf %66, %66 : f32
    %cst_17 = arith.constant 1.000000e+00 : f32
    %93 = arith.subf %cst_17, %92 : f32
    %cst_18 = arith.constant 1.000000e+00 : f32
    %94 = arith.mulf %cst_18, %93 : f32
    %95 = arith.mulf %94, %69 : f32
    %96 = arith.subf %95, %66 : f32
    %97 = arith.addf %69, %88 : f32
    %98 = arith.mulf %75, %97 : f32
    %99 = arith.addf %66, %98 : f32
    %100 = arith.addf %96, %91 : f32
    %101 = arith.mulf %75, %100 : f32
    %102 = arith.addf %69, %101 : f32
    %c0_19 = arith.constant 0 : index
    %103 = arith.index_cast %c2_i32 : i32 to index
    %104 = memref.load %arg4[%c0_19, %103] : memref<2x7xf32, #tpu.memory_space<smem>>
    memref.store %99, %arg4[%c0_19, %103] : memref<2x7xf32, #tpu.memory_space<smem>>
    %c1_20 = arith.constant 1 : index
    %105 = arith.index_cast %c2_i32 : i32 to index
    %106 = memref.load %arg4[%c1_20, %105] : memref<2x7xf32, #tpu.memory_space<smem>>
    memref.store %102, %arg4[%c1_20, %105] : memref<2x7xf32, #tpu.memory_space<smem>>
    %c3_i32 = arith.constant 3 : i32
    %107 = arith.index_cast %c3_i32 : i32 to index
    %108 = memref.load %arg0[%107] : memref<7xf32, #tpu.memory_space<smem>>
    %109 = vector.broadcast %99 : f32 to vector<2x128xf32>
    %110 = arith.mulf %109, %0 : vector<2x128xf32>
    %111 = vector.broadcast %102 : f32 to vector<2x128xf32>
    %112 = arith.mulf %111, %1 : vector<2x128xf32>
    %113 = arith.addf %110, %112 : vector<2x128xf32>
    %114 = arith.addf %113, %2 : vector<2x128xf32>
    %115 = math.tanh %114 : vector<2x128xf32>
    %116 = arith.mulf %115, %3 : vector<2x128xf32>
    %cst_21 = arith.constant dense<0.000000e+00> : vector<2xf32>
    %117 = vector.multi_reduction <add>, %116, %cst_21 [1] : vector<2x128xf32> to vector<2xf32>
    %118 = vector.shape_cast %117 : vector<2xf32> to vector<2x1xf32>
    %119 = vector.extract_strided_slice %118 {offsets = [0, 0], sizes = [1, 1], strides = [1, 1]} : vector<2x1xf32> to vector<1x1xf32>
    %120 = vector.extract %119[0, 0] : f32 from vector<1x1xf32>
    %121 = arith.addf %120, %4 : f32
    %122 = vector.extract_strided_slice %118 {offsets = [1, 0], sizes = [1, 1], strides = [1, 1]} : vector<2x1xf32> to vector<1x1xf32>
    %123 = vector.extract %122[0, 0] : f32 from vector<1x1xf32>
    %124 = arith.addf %123, %5 : f32
    %125 = arith.mulf %99, %99 : f32
    %cst_22 = arith.constant 1.000000e+00 : f32
    %126 = arith.subf %cst_22, %125 : f32
    %cst_23 = arith.constant 1.000000e+00 : f32
    %127 = arith.mulf %cst_23, %126 : f32
    %128 = arith.mulf %127, %102 : f32
    %129 = arith.subf %128, %99 : f32
    %130 = arith.addf %102, %121 : f32
    %131 = arith.mulf %108, %130 : f32
    %132 = arith.addf %99, %131 : f32
    %133 = arith.addf %129, %124 : f32
    %134 = arith.mulf %108, %133 : f32
    %135 = arith.addf %102, %134 : f32
    %c0_24 = arith.constant 0 : index
    %136 = arith.index_cast %c3_i32 : i32 to index
    %137 = memref.load %arg4[%c0_24, %136] : memref<2x7xf32, #tpu.memory_space<smem>>
    memref.store %132, %arg4[%c0_24, %136] : memref<2x7xf32, #tpu.memory_space<smem>>
    %c1_25 = arith.constant 1 : index
    %138 = arith.index_cast %c3_i32 : i32 to index
    %139 = memref.load %arg4[%c1_25, %138] : memref<2x7xf32, #tpu.memory_space<smem>>
    memref.store %135, %arg4[%c1_25, %138] : memref<2x7xf32, #tpu.memory_space<smem>>
    %c4_i32 = arith.constant 4 : i32
    %140 = arith.index_cast %c4_i32 : i32 to index
    %141 = memref.load %arg0[%140] : memref<7xf32, #tpu.memory_space<smem>>
    %142 = vector.broadcast %132 : f32 to vector<2x128xf32>
    %143 = arith.mulf %142, %0 : vector<2x128xf32>
    %144 = vector.broadcast %135 : f32 to vector<2x128xf32>
    %145 = arith.mulf %144, %1 : vector<2x128xf32>
    %146 = arith.addf %143, %145 : vector<2x128xf32>
    %147 = arith.addf %146, %2 : vector<2x128xf32>
    %148 = math.tanh %147 : vector<2x128xf32>
    %149 = arith.mulf %148, %3 : vector<2x128xf32>
    %cst_26 = arith.constant dense<0.000000e+00> : vector<2xf32>
    %150 = vector.multi_reduction <add>, %149, %cst_26 [1] : vector<2x128xf32> to vector<2xf32>
    %151 = vector.shape_cast %150 : vector<2xf32> to vector<2x1xf32>
    %152 = vector.extract_strided_slice %151 {offsets = [0, 0], sizes = [1, 1], strides = [1, 1]} : vector<2x1xf32> to vector<1x1xf32>
    %153 = vector.extract %152[0, 0] : f32 from vector<1x1xf32>
    %154 = arith.addf %153, %4 : f32
    %155 = vector.extract_strided_slice %151 {offsets = [1, 0], sizes = [1, 1], strides = [1, 1]} : vector<2x1xf32> to vector<1x1xf32>
    %156 = vector.extract %155[0, 0] : f32 from vector<1x1xf32>
    %157 = arith.addf %156, %5 : f32
    %158 = arith.mulf %132, %132 : f32
    %cst_27 = arith.constant 1.000000e+00 : f32
    %159 = arith.subf %cst_27, %158 : f32
    %cst_28 = arith.constant 1.000000e+00 : f32
    %160 = arith.mulf %cst_28, %159 : f32
    %161 = arith.mulf %160, %135 : f32
    %162 = arith.subf %161, %132 : f32
    %163 = arith.addf %135, %154 : f32
    %164 = arith.mulf %141, %163 : f32
    %165 = arith.addf %132, %164 : f32
    %166 = arith.addf %162, %157 : f32
    %167 = arith.mulf %141, %166 : f32
    %168 = arith.addf %135, %167 : f32
    %c0_29 = arith.constant 0 : index
    %169 = arith.index_cast %c4_i32 : i32 to index
    %170 = memref.load %arg4[%c0_29, %169] : memref<2x7xf32, #tpu.memory_space<smem>>
    memref.store %165, %arg4[%c0_29, %169] : memref<2x7xf32, #tpu.memory_space<smem>>
    %c1_30 = arith.constant 1 : index
    %171 = arith.index_cast %c4_i32 : i32 to index
    %172 = memref.load %arg4[%c1_30, %171] : memref<2x7xf32, #tpu.memory_space<smem>>
    memref.store %168, %arg4[%c1_30, %171] : memref<2x7xf32, #tpu.memory_space<smem>>
    %c5_i32 = arith.constant 5 : i32
    %173 = arith.index_cast %c5_i32 : i32 to index
    %174 = memref.load %arg0[%173] : memref<7xf32, #tpu.memory_space<smem>>
    %175 = vector.broadcast %165 : f32 to vector<2x128xf32>
    %176 = arith.mulf %175, %0 : vector<2x128xf32>
    %177 = vector.broadcast %168 : f32 to vector<2x128xf32>
    %178 = arith.mulf %177, %1 : vector<2x128xf32>
    %179 = arith.addf %176, %178 : vector<2x128xf32>
    %180 = arith.addf %179, %2 : vector<2x128xf32>
    %181 = math.tanh %180 : vector<2x128xf32>
    %182 = arith.mulf %181, %3 : vector<2x128xf32>
    %cst_31 = arith.constant dense<0.000000e+00> : vector<2xf32>
    %183 = vector.multi_reduction <add>, %182, %cst_31 [1] : vector<2x128xf32> to vector<2xf32>
    %184 = vector.shape_cast %183 : vector<2xf32> to vector<2x1xf32>
    %185 = vector.extract_strided_slice %184 {offsets = [0, 0], sizes = [1, 1], strides = [1, 1]} : vector<2x1xf32> to vector<1x1xf32>
    %186 = vector.extract %185[0, 0] : f32 from vector<1x1xf32>
    %187 = arith.addf %186, %4 : f32
    %188 = vector.extract_strided_slice %184 {offsets = [1, 0], sizes = [1, 1], strides = [1, 1]} : vector<2x1xf32> to vector<1x1xf32>
    %189 = vector.extract %188[0, 0] : f32 from vector<1x1xf32>
    %190 = arith.addf %189, %5 : f32
    %191 = arith.mulf %165, %165 : f32
    %cst_32 = arith.constant 1.000000e+00 : f32
    %192 = arith.subf %cst_32, %191 : f32
    %cst_33 = arith.constant 1.000000e+00 : f32
    %193 = arith.mulf %cst_33, %192 : f32
    %194 = arith.mulf %193, %168 : f32
    %195 = arith.subf %194, %165 : f32
    %196 = arith.addf %168, %187 : f32
    %197 = arith.mulf %174, %196 : f32
    %198 = arith.addf %165, %197 : f32
    %199 = arith.addf %195, %190 : f32
    %200 = arith.mulf %174, %199 : f32
    %201 = arith.addf %168, %200 : f32
    %c0_34 = arith.constant 0 : index
    %202 = arith.index_cast %c5_i32 : i32 to index
    %203 = memref.load %arg4[%c0_34, %202] : memref<2x7xf32, #tpu.memory_space<smem>>
    memref.store %198, %arg4[%c0_34, %202] : memref<2x7xf32, #tpu.memory_space<smem>>
    %c1_35 = arith.constant 1 : index
    %204 = arith.index_cast %c5_i32 : i32 to index
    %205 = memref.load %arg4[%c1_35, %204] : memref<2x7xf32, #tpu.memory_space<smem>>
    memref.store %201, %arg4[%c1_35, %204] : memref<2x7xf32, #tpu.memory_space<smem>>
    %c6_i32 = arith.constant 6 : i32
    %206 = arith.index_cast %c6_i32 : i32 to index
    %207 = memref.load %arg0[%206] : memref<7xf32, #tpu.memory_space<smem>>
    %208 = vector.broadcast %198 : f32 to vector<2x128xf32>
    %209 = arith.mulf %208, %0 : vector<2x128xf32>
    %210 = vector.broadcast %201 : f32 to vector<2x128xf32>
    %211 = arith.mulf %210, %1 : vector<2x128xf32>
    %212 = arith.addf %209, %211 : vector<2x128xf32>
    %213 = arith.addf %212, %2 : vector<2x128xf32>
    %214 = math.tanh %213 : vector<2x128xf32>
    %215 = arith.mulf %214, %3 : vector<2x128xf32>
    %cst_36 = arith.constant dense<0.000000e+00> : vector<2xf32>
    %216 = vector.multi_reduction <add>, %215, %cst_36 [1] : vector<2x128xf32> to vector<2xf32>
    %217 = vector.shape_cast %216 : vector<2xf32> to vector<2x1xf32>
    %218 = vector.extract_strided_slice %217 {offsets = [0, 0], sizes = [1, 1], strides = [1, 1]} : vector<2x1xf32> to vector<1x1xf32>
    %219 = vector.extract %218[0, 0] : f32 from vector<1x1xf32>
    %220 = arith.addf %219, %4 : f32
    %221 = vector.extract_strided_slice %217 {offsets = [1, 0], sizes = [1, 1], strides = [1, 1]} : vector<2x1xf32> to vector<1x1xf32>
    %222 = vector.extract %221[0, 0] : f32 from vector<1x1xf32>
    %223 = arith.addf %222, %5 : f32
    %224 = arith.mulf %198, %198 : f32
    %cst_37 = arith.constant 1.000000e+00 : f32
    %225 = arith.subf %cst_37, %224 : f32
    %cst_38 = arith.constant 1.000000e+00 : f32
    %226 = arith.mulf %cst_38, %225 : f32
    %227 = arith.mulf %226, %201 : f32
    %228 = arith.subf %227, %198 : f32
    %229 = arith.addf %201, %220 : f32
    %230 = arith.mulf %207, %229 : f32
    %231 = arith.addf %198, %230 : f32
    %232 = arith.addf %228, %223 : f32
    %233 = arith.mulf %207, %232 : f32
    %234 = arith.addf %201, %233 : f32
    %c0_39 = arith.constant 0 : index
    %235 = arith.index_cast %c6_i32 : i32 to index
    %236 = memref.load %arg4[%c0_39, %235] : memref<2x7xf32, #tpu.memory_space<smem>>
    memref.store %231, %arg4[%c0_39, %235] : memref<2x7xf32, #tpu.memory_space<smem>>
    %c1_40 = arith.constant 1 : index
    %237 = arith.index_cast %c6_i32 : i32 to index
    %238 = memref.load %arg4[%c1_40, %237] : memref<2x7xf32, #tpu.memory_space<smem>>
    memref.store %234, %arg4[%c1_40, %237] : memref<2x7xf32, #tpu.memory_space<smem>>
    %c7_i32 = arith.constant 7 : i32
    return
  }
}

</mosaic_0001>

<llo_original>
// kernel: tpu_custom_call.1
$region0: #{tpu_custom_call.1}
  #allocation0 [shape = 'u32[]', space=smem, size = 0x4, offset = 0x4, fixed_abs, tag = 'smem constant byte address 0x4 - core index']
  #allocation1 [shape = 'u32[72,128]{1,0:T(1,128)}', space=vmem, size = 0x9000, scoped, tag = 'internal scratch']
  %s0 = inlined_call_operand.hbm [shape: f32[7], index: 0, kind: input, shape index: {}]
  %s1 = inlined_call_operand.hbm [shape: f32[2], index: 1, kind: input, shape index: {}]
  %s2 = inlined_call_operand.vmem [shape: f32[2], index: 2, kind: input, shape index: {}]
  %s3 = inlined_call_operand.hbm [shape: f32[8,128], index: 3, kind: input, shape index: {}]
  %s4 = inlined_call_operand.hbm [shape: f32[2,7], index: 4, kind: output, shape index: {}]
  %s5 = sld [smem:[#allocation0]]
  $region42: #{tpu_custom_call.1} parent=0
    _
  %s7 = ssub.s32 1, %s5
  %s8 = scalar_select 0, %s7, %s5
  $region1: #{tpu_custom_call.1} parent=0
    #allocation2 [shape = 'u8[512]{0}', space=smem, size = 0x200, scoped, tag = 'input window, operand 0, single buffered']
    #allocation3 [shape = 's32[1]{0}', space=sflag, size = 0x4, scoped, tag = 'scoped memory for tpu_custom_call.1']
    #allocation4 [shape = 's32[1]{0}', space=sflag, size = 0x4, scoped, tag = 'scoped memory for tpu_custom_call.1']
    #allocation5 [shape = 's32[1]{0}', space=sflag, size = 0x4, scoped, tag = 'scoped memory for tpu_custom_call.1']
    #allocation6 [shape = 's32[1]{0}', space=sflag, size = 0x4, scoped, tag = 'scoped memory for tpu_custom_call.1']
    #allocation7 [shape = 'u8[512]{0}', space=smem, size = 0x200, scoped, tag = 'input window, operand 1, single buffered']
    #allocation8 [shape = 's32[1]{0}', space=sflag, size = 0x4, scoped, tag = 'scoped memory for tpu_custom_call.1']
    #allocation9 [shape = 'u8[512]{0}', space=smem, size = 0x200, scoped, tag = 'input window, operand 2, single buffered']
    #allocation10 [shape = 'u8[4096]{0}', space=vmem, size = 0x1000, scoped, tag = 'input window, operand 3, single buffered']
    #allocation11 [shape = 'u8[1024]{0}', space=smem, size = 0x400, scoped, tag = 'output window, operand 0, single buffered']
    %9 = vsyncpa [#allocation4], 0
    %10 = vsyncpa [#allocation8], 0
    %11 = vsyncpa [#allocation6], 0
    %12 = vsyncpa [#allocation3], 0
    %13 = vsyncpa [#allocation5], 0
    // Predicated region
    $region2: #{tpu_custom_call.1} parent=1 // pred_check
      _
    $region3: #{tpu_custom_call.1} parent=1 // pred_check_branch
      %15 = sbr.rel (0) target = $region5
    $region4: #{tpu_custom_call.1} parent=1 // pred_region
      %17 = vsyncadd [#allocation4], 0
      %s19 = sshll.u32 %s0, 4
      %s20 = int_to_ptr.hbm [resolvable:$true] %s19
      %22 = dma.hbm_to_smem %s20, 16, [#allocation2], [#allocation4]
    $region5: #{tpu_custom_call.1} parent=1 // pred_fallthru
      _
    // Predicated region
    $region6: #{tpu_custom_call.1} parent=1 // pred_check
      _
    $region7: #{tpu_custom_call.1} parent=1 // pred_check_branch
      %24 = sbr.rel (0) target = $region9
    $region8: #{tpu_custom_call.1} parent=1 // pred_region
      %26 = vsyncadd [#allocation8], 0
      %s28 = sshll.u32 %s1, 4
      %s29 = int_to_ptr.hbm [resolvable:$true] %s28
      %31 = dma.hbm_to_smem %s29, 16, [#allocation7], [#allocation8]
    $region9: #{tpu_custom_call.1} parent=1 // pred_fallthru
      _
    // Predicated region
    $region10: #{tpu_custom_call.1} parent=1 // pred_check
      _
    $region11: #{tpu_custom_call.1} parent=1 // pred_check_branch
      %33 = sbr.rel (0) target = $region13
    $region12: #{tpu_custom_call.1} parent=1 // pred_region
      %35 = vsyncadd [#allocation6], 0
      %s37 = sshll.u32 %s2, 4
      %s38 = int_to_ptr.vmem [resolvable:$true] %s37
      %40 = dma.vmem_to_smem %s38, 16, [#allocation9], [#allocation6]
    $region13: #{tpu_custom_call.1} parent=1 // pred_fallthru
      _
    // Predicated region
    $region14: #{tpu_custom_call.1} parent=1 // pred_check
      _
    $region15: #{tpu_custom_call.1} parent=1 // pred_check_branch
      %42 = sbr.rel (0) target = $region17
    $region16: #{tpu_custom_call.1} parent=1 // pred_region
      %44 = vsyncadd [#allocation3], 0
      %s46 = sshll.u32 %s3, 4
      %s47 = int_to_ptr.hbm [resolvable:$true] %s46
      %s48 = sshll.u32 [#allocation10], 4
      %s49 = int_to_ptr.vmem [resolvable:$true] %s48
      %51 = dma.hbm_to_vmem [thread:$0]  %s47, 128, %s49, [#allocation3]
    $region17: #{tpu_custom_call.1} parent=1 // pred_fallthru
      _
    // Predicated region
    $region18: #{tpu_custom_call.1} parent=1 // pred_check
      _
    $region19: #{tpu_custom_call.1} parent=1 // pred_check_branch
      %53 = sbr.rel (0) target = $region21
    $region20: #{tpu_custom_call.1} parent=1 // pred_region
      %55 = dma.done [#allocation4], 16
    $region21: #{tpu_custom_call.1} parent=1 // pred_fallthru
      _
    // Predicated region
    $region22: #{tpu_custom_call.1} parent=1 // pred_check
      _
    $region23: #{tpu_custom_call.1} parent=1 // pred_check_branch
      %57 = sbr.rel (0) target = $region25
    $region24: #{tpu_custom_call.1} parent=1 // pred_region
      %59 = dma.done [#allocation8], 16
    $region25: #{tpu_custom_call.1} parent=1 // pred_fallthru
      _
    // Predicated region
    $region26: #{tpu_custom_call.1} parent=1 // pred_check
      _
    $region27: #{tpu_custom_call.1} parent=1 // pred_check_branch
      %61 = sbr.rel (0) target = $region29
    $region28: #{tpu_custom_call.1} parent=1 // pred_region
      %63 = dma.done [#allocation6], 16
    $region29: #{tpu_custom_call.1} parent=1 // pred_fallthru
      _
    // Predicated region
    $region30: #{tpu_custom_call.1} parent=1 // pred_check
      _
    $region31: #{tpu_custom_call.1} parent=1 // pred_check_branch
      %65 = sbr.rel (0) target = $region33
    $region32: #{tpu_custom_call.1} parent=1 // pred_region
      %67 = dma.done [#allocation3], 128
    $region33: #{tpu_custom_call.1} parent=1 // pred_fallthru
      _
    %68 = sfence
    %v69 = vld [vmem:[#allocation10] sm:$0x3]
    %v70 = vld [vmem:[#allocation10 + $0x2] sm:$0x3]
    %v71 = vld [vmem:[#allocation10 + $0x4] sm:$0x3]
    %v72 = vld [vmem:[#allocation10 + $0x6] sm:$0x3]
    %s73 = sld [smem:[#allocation9]]
    %s74 = sld [smem:[#allocation9 + $0x1]]
    %s75 = sld [smem:[#allocation7]]
    %s76 = sld [smem:[#allocation7 + $0x1]]
    %s77 = sld [smem:[#allocation2]]
    %v78 = vstv %s75
    %v79 = vmul.f32 %v78, %v69
    %v80 = vstv %s76
    %v81 = vmul.f32 %v80, %v70
    %v82 = vadd.f32 %v79, %v81
    %v83 = vadd.f32 %v82, %v71
    %v84 = vtanh.pop %v83
    %v85 = vmul.f32 %v84, %v72
    %vm86 = vcmask 1041408
    %v87 = vsel %vm86, %v85, 0.0
    %88 = vadd.xlane.f32.xlu0 %v87
    %v89 = vpop.xlane.xlu0 %88
    %s90 = vtos %v89
    %s91 = sadd.f32 %s90, %s73
    %v92 = vrot.slane %v89, 1
    %s93 = vtos %v92
    %s94 = sadd.f32 %s93, %s74
    %s95 = smul.f32 %s75, %s75
    %s96 = ssub.f32 1.0, %s95
    %s97 = smul.f32 %s96, %s76
    %s98 = ssub.f32 %s97, %s75
    %s99 = sadd.f32 %s76, %s91
    %s100 = smul.f32 %s77, %s99
    %s101 = sadd.f32 %s75, %s100
    %s102 = sadd.f32 %s98, %s94
    %s103 = smul.f32 %s77, %s102
    %s104 = sadd.f32 %s76, %s103
    %s105 = scalar_lea.smem [#allocation11], 0
    %106 = sst [smem:[%s105]] %s101
    %s107 = scalar_lea.smem [#allocation11], 128
    %108 = sst [smem:[%s107]] %s104
    %s109 = sld [smem:[#allocation2 + $0x1]]
    %v110 = vstv %s101
    %v111 = vmul.f32 %v110, %v69
    %v112 = vstv %s104
    %v113 = vmul.f32 %v112, %v70
    %v114 = vadd.f32 %v111, %v113
    %v115 = vadd.f32 %v114, %v71
    %v116 = vtanh.pop %v115
    %v117 = vmul.f32 %v116, %v72
    %v118 = vsel %vm86, %v117, 0.0
    %119 = vadd.xlane.f32.xlu0 %v118
    %v120 = vpop.xlane.xlu0 %119
    %s121 = vtos %v120
    %s122 = sadd.f32 %s121, %s73
    %v123 = vrot.slane %v120, 1
    %s124 = vtos %v123
    %s125 = sadd.f32 %s124, %s74
    %s126 = smul.f32 %s101, %s101
    %s127 = ssub.f32 1.0, %s126
    %s128 = smul.f32 %s127, %s104
    %s129 = ssub.f32 %s128, %s101
    %s130 = sadd.f32 %s104, %s122
    %s131 = smul.f32 %s109, %s130
    %s132 = sadd.f32 %s101, %s131
    %s133 = sadd.f32 %s129, %s125
    %s134 = smul.f32 %s109, %s133
    %s135 = sadd.f32 %s104, %s134
    %s136 = scalar_lea.smem [#allocation11], 1
    %137 = sst [smem:[%s136]] %s132
    %s138 = scalar_lea.smem [#allocation11], 129
    %139 = sst [smem:[%s138]] %s135
    %s140 = sld [smem:[#allocation2 + $0x2]]
    %v141 = vstv %s132
    %v142 = vmul.f32 %v141, %v69
    %v143 = vstv %s135
    %v144 = vmul.f32 %v143, %v70
    %v145 = vadd.f32 %v142, %v144
    %v146 = vadd.f32 %v145, %v71
    %v147 = vtanh.pop %v146
    %v148 = vmul.f32 %v147, %v72
    %v149 = vsel %vm86, %v148, 0.0
    %150 = vadd.xlane.f32.xlu0 %v149
    %v151 = vpop.xlane.xlu0 %150
    %s152 = vtos %v151
    %s153 = sadd.f32 %s152, %s73
    %v154 = vrot.slane %v151, 1
    %s155 = vtos %v154
    %s156 = sadd.f32 %s155, %s74
    %s157 = smul.f32 %s132, %s132
    %s158 = ssub.f32 1.0, %s157
    %s159 = smul.f32 %s158, %s135
    %s160 = ssub.f32 %s159, %s132
    %s161 = sadd.f32 %s135, %s153
    %s162 = smul.f32 %s140, %s161
    %s163 = sadd.f32 %s132, %s162
    %s164 = sadd.f32 %s160, %s156
    %s165 = smul.f32 %s140, %s164
    %s166 = sadd.f32 %s135, %s165
    %s167 = scalar_lea.smem [#allocation11], 2
    %168 = sst [smem:[%s167]] %s163
    %s169 = scalar_lea.smem [#allocation11], 130
    %170 = sst [smem:[%s169]] %s166
    %s171 = sld [smem:[#allocation2 + $0x3]]
    %v172 = vstv %s163
    %v173 = vmul.f32 %v172, %v69
    %v174 = vstv %s166
    %v175 = vmul.f32 %v174, %v70
    %v176 = vadd.f32 %v173, %v175
    %v177 = vadd.f32 %v176, %v71
    %v178 = vtanh.pop %v177
    %v179 = vmul.f32 %v178, %v72
    %v180 = vsel %vm86, %v179, 0.0
    %181 = vadd.xlane.f32.xlu0 %v180
    %v182 = vpop.xlane.xlu0 %181
    %s183 = vtos %v182
    %s184 = sadd.f32 %s183, %s73
    %v185 = vrot.slane %v182, 1
    %s186 = vtos %v185
    %s187 = sadd.f32 %s186, %s74
    %s188 = smul.f32 %s163, %s163
    %s189 = ssub.f32 1.0, %s188
    %s190 = smul.f32 %s189, %s166
    %s191 = ssub.f32 %s190, %s163
    %s192 = sadd.f32 %s166, %s184
    %s193 = smul.f32 %s171, %s192
    %s194 = sadd.f32 %s163, %s193
    %s195 = sadd.f32 %s191, %s187
    %s196 = smul.f32 %s171, %s195
    %s197 = sadd.f32 %s166, %s196
    %s198 = scalar_lea.smem [#allocation11], 3
    %199 = sst [smem:[%s198]] %s194
    %s200 = scalar_lea.smem [#allocation11], 131
    %201 = sst [smem:[%s200]] %s197
    %s202 = sld [smem:[#allocation2 + $0x4]]
    %v203 = vstv %s194
    %v204 = vmul.f32 %v203, %v69
    %v205 = vstv %s197
    %v206 = vmul.f32 %v205, %v70
    %v207 = vadd.f32 %v204, %v206
    %v208 = vadd.f32 %v207, %v71
    %v209 = vtanh.pop %v208
    %v210 = vmul.f32 %v209, %v72
    %v211 = vsel %vm86, %v210, 0.0
    %212 = vadd.xlane.f32.xlu0 %v211
    %v213 = vpop.xlane.xlu0 %212
    %s214 = vtos %v213
    %s215 = sadd.f32 %s214, %s73
    %v216 = vrot.slane %v213, 1
    %s217 = vtos %v216
    %s218 = sadd.f32 %s217, %s74
    %s219 = smul.f32 %s194, %s194
    %s220 = ssub.f32 1.0, %s219
    %s221 = smul.f32 %s220, %s197
    %s222 = ssub.f32 %s221, %s194
    %s223 = sadd.f32 %s197, %s215
    %s224 = smul.f32 %s202, %s223
    %s225 = sadd.f32 %s194, %s224
    %s226 = sadd.f32 %s222, %s218
    %s227 = smul.f32 %s202, %s226
    %s228 = sadd.f32 %s197, %s227
    %s229 = scalar_lea.smem [#allocation11], 4
    %230 = sst [smem:[%s229]] %s225
    %s231 = scalar_lea.smem [#allocation11], 132
    %232 = sst [smem:[%s231]] %s228
    %s233 = sld [smem:[#allocation2 + $0x5]]
    %v234 = vstv %s225
    %v235 = vmul.f32 %v234, %v69
    %v236 = vstv %s228
    %v237 = vmul.f32 %v236, %v70
    %v238 = vadd.f32 %v235, %v237
    %v239 = vadd.f32 %v238, %v71
    %v240 = vtanh.pop %v239
    %v241 = vmul.f32 %v240, %v72
    %v242 = vsel %vm86, %v241, 0.0
    %243 = vadd.xlane.f32.xlu0 %v242
    %v244 = vpop.xlane.xlu0 %243
    %s245 = vtos %v244
    %s246 = sadd.f32 %s245, %s73
    %v247 = vrot.slane %v244, 1
    %s248 = vtos %v247
    %s249 = sadd.f32 %s248, %s74
    %s250 = smul.f32 %s225, %s225
    %s251 = ssub.f32 1.0, %s250
    %s252 = smul.f32 %s251, %s228
    %s253 = ssub.f32 %s252, %s225
    %s254 = sadd.f32 %s228, %s246
    %s255 = smul.f32 %s233, %s254
    %s256 = sadd.f32 %s225, %s255
    %s257 = sadd.f32 %s253, %s249
    %s258 = smul.f32 %s233, %s257
    %s259 = sadd.f32 %s228, %s258
    %s260 = scalar_lea.smem [#allocation11], 5
    %261 = sst [smem:[%s260]] %s256
    %s262 = scalar_lea.smem [#allocation11], 133
    %263 = sst [smem:[%s262]] %s259
    %s264 = sld [smem:[#allocation2 + $0x6]]
    %v265 = vstv %s256
    %v266 = vmul.f32 %v265, %v69
    %v267 = vstv %s259
    %v268 = vmul.f32 %v267, %v70
    %v269 = vadd.f32 %v266, %v268
    %v270 = vadd.f32 %v269, %v71
    %v271 = vtanh.pop %v270
    %v272 = vmul.f32 %v271, %v72
    %v273 = vsel %vm86, %v272, 0.0
    %274 = vadd.xlane.f32.xlu0 %v273
    %v275 = vpop.xlane.xlu0 %274
    %s276 = vtos %v275
    %s277 = sadd.f32 %s276, %s73
    %v278 = vrot.slane %v275, 1
    %s279 = vtos %v278
    %s280 = sadd.f32 %s279, %s74
    %s281 = smul.f32 %s256, %s256
    %s282 = ssub.f32 1.0, %s281
    %s283 = smul.f32 %s282, %s259
    %s284 = ssub.f32 %s283, %s256
    %s285 = sadd.f32 %s259, %s277
    %s286 = smul.f32 %s264, %s285
    %s287 = sadd.f32 %s256, %s286
    %s288 = sadd.f32 %s284, %s280
    %s289 = smul.f32 %s264, %s288
    %s290 = sadd.f32 %s259, %s289
    %s291 = scalar_lea.smem [#allocation11], 6
    %292 = sst [smem:[%s291]] %s287
    %s293 = scalar_lea.smem [#allocation11], 134
    %294 = sst [smem:[%s293]] %s290
    // Predicated region
    $region34: #{tpu_custom_call.1} parent=1 // pred_check
      _
    $region35: #{tpu_custom_call.1} parent=1 // pred_check_branch
      %296 = sbr.rel (0) target = $region37
    $region36: #{tpu_custom_call.1} parent=1 // pred_region
      %298 = vsyncadd [#allocation5], 0
      %s300 = sshll.u32 %s4, 4
      %s301 = int_to_ptr.hbm [resolvable:$true] %s300
      %303 = dma.smem_to_hbm [#allocation11], 32, %s301, [#allocation5]
    $region37: #{tpu_custom_call.1} parent=1 // pred_fallthru
      _
    // Predicated region
    $region38: #{tpu_custom_call.1} parent=1 // pred_check
      _
    $region39: #{tpu_custom_call.1} parent=1 // pred_check_branch
      %305 = sbr.rel (0) target = $region41
    $region40: #{tpu_custom_call.1} parent=1 // pred_region
      %307 = dma.done [#allocation5], 32
    $region41: #{tpu_custom_call.1} parent=1 // pred_fallthru
      _
    %308 = sfence
    %309 = vsyncpa [#allocation3], 1
    %310 = vsyncpa [#allocation4], 1
    %311 = vsyncpa [#allocation8], 1
    %312 = vsyncpa [#allocation5], 1
    %313 = vsyncpa [#allocation6], 1

</llo_original>
